<compile_context>
chip_gen: v5e
topology: v5e:2x2
jax: 0.10.0
libtpu: 0.0.40
codegen_flags: <defaults>
</compile_context>

<pallas_src>
import jax
import jax.numpy as jnp
from jax.experimental import pallas as pl
from jax.experimental.pallas import tpu as pltpu


def _mlp_kernel(x_ref, w0_ref, b0_ref, w1_ref, b1_ref, w2_ref, b2_ref, o_ref):
    """Fused 3-layer MLP: relu(relu(x@W0+b0)@W1+b1)@W2+b2.

    x streams in as f32 and is cast to bf16 in-register for the MXU; all
    matmuls accumulate in f32 (preferred_element_type); bias + ReLU in f32.
    """
    x = x_ref[...].astype(jnp.bfloat16)                       # (tile, 64)
    h = jnp.dot(x, w0_ref[...], preferred_element_type=jnp.float32)
    h = jnp.maximum(h + b0_ref[...], 0.0)
    h = jnp.dot(h.astype(jnp.bfloat16), w1_ref[...],
                preferred_element_type=jnp.float32)
    h = jnp.maximum(h + b1_ref[...], 0.0)
    o = jnp.dot(h.astype(jnp.bfloat16), w2_ref[...],
                preferred_element_type=jnp.float32)
    o_ref[...] = (o + b2_ref[...]).astype(o_ref.dtype)


def transformation_forward(x, params, *, block_b=512, out_dtype=jnp.float32):
    """Run the Transformation MLP with a single fused Pallas kernel.

    x:       (B, input_dim) float32 -- streamed as-is, no host-side padding.
    params:  dict with w0 (in,hid), b0 (1,hid), w1 (hid,hid), b1 (1,hid),
             w2 (hid,out), b2 (1,out)   -- already transposed vs. PyTorch.
    """
    B, d_in = x.shape
    d_hid = params["w0"].shape[1]
    d_out = params["w2"].shape[1]

    def _round16(n):
        return ((n + 15) // 16) * 16

    # Batch tile: multiple of 16 (bf16 sublane packing). If the whole batch
    # would fit in one tile, split it so grid >= 2 and v7x's 2nd TC gets work.
    tile = _round16(min(block_b, B))
    if B > 16 and pl.cdiv(B, tile) < 2:
        tile = _round16(pl.cdiv(B, 2))
    grid = (pl.cdiv(B, tile),)   # ragged last tile is masked by Pallas

    # Weights to bf16 for the MXU; biases stay f32. (~160 KB total, resident.)
    w0 = params["w0"].astype(jnp.bfloat16)
    w1 = params["w1"].astype(jnp.bfloat16)
    w2 = params["w2"].astype(jnp.bfloat16)
    b0 = params["b0"].astype(jnp.float32)
    b1 = params["b1"].astype(jnp.float32)
    b2 = params["b2"].astype(jnp.float32)

    def full(r, c):
        return pl.BlockSpec((r, c), lambda i: (0, 0))

    out = pl.pallas_call(
        _mlp_kernel,
        out_shape=jax.ShapeDtypeStruct((B, d_out), out_dtype),
        grid=grid,
        in_specs=[
            pl.BlockSpec((tile, d_in), lambda i: (i, 0)),      # x tile (f32)
            full(d_in, d_hid),                                 # w0
            full(1, d_hid),                                    # b0
            full(d_hid, d_hid),                                # w1
            full(1, d_hid),                                    # b1
            full(d_hid, d_out),                                # w2
            full(1, d_out),                                    # b2
        ],
        out_specs=pl.BlockSpec((tile, d_out), lambda i: (i, 0)),
        compiler_params=pltpu.CompilerParams(
            dimension_semantics=("parallel",),
        ),
    )(x, w0, b0, w1, b1, w2, b2)

    return out


def _orthogonal(key, rows, cols):
    """torch.nn.init.orthogonal_-style init for a (rows, cols) weight."""
    n, m = (rows, cols) if rows >= cols else (cols, rows)
    a = jax.random.normal(key, (n, m), dtype=jnp.float32)
    q, r = jnp.linalg.qr(a)
    s = jnp.sign(jnp.diagonal(r))
    s = jnp.where(s == 0, 1.0, s)          # guard exactly-zero diagonal
    q = q * s
    if rows < cols:
        q = q.T
    return q[:rows, :cols]


def make_params(key, input_dim=64, hidden_dim=128, output_dim=128):
    """Parameter init mirroring the PyTorch module.

    PyTorch stores Linear weight as (out, in); we store the transpose (in, out)
    so the kernel can do x @ W directly. Biases use PyTorch's default
    U(-1/sqrt(fan_in), 1/sqrt(fan_in)) init (init_weights leaves them alone).
    """
    ks = jax.random.split(key, 6)

    def bias(k, fan_in, dim):
        bound = 1.0 / jnp.sqrt(jnp.float32(fan_in))
        return jax.random.uniform(k, (1, dim), jnp.float32, -bound, bound)

    return {
        "w0": _orthogonal(ks[0], input_dim, hidden_dim),
        "b0": bias(ks[1], input_dim, hidden_dim),
        "w1": _orthogonal(ks[2], hidden_dim, hidden_dim),
        "b1": bias(ks[3], hidden_dim, hidden_dim),
        "w2": _orthogonal(ks[4], hidden_dim, output_dim),
        "b2": bias(ks[5], hidden_dim, output_dim),
    }


def reference_forward(x, p):
    """Pure-JAX reference emulating the kernel's bf16-input / f32-acc math."""
    bf = lambda a: a.astype(jnp.bfloat16)
    h = jnp.dot(bf(x), bf(p["w0"]), preferred_element_type=jnp.float32) + p["b0"]
    h = jnp.maximum(h, 0.0)
    h = jnp.dot(bf(h), bf(p["w1"]), preferred_element_type=jnp.float32) + p["b1"]
    h = jnp.maximum(h, 0.0)
    return jnp.dot(bf(h), bf(p["w2"]), preferred_element_type=jnp.float32) + p["b2"]


if __name__ == "__main__":
    key = jax.random.PRNGKey(0)
    k_x, k_p = jax.random.split(key)

    # Module-implied dims (defaults): input 64 -> hidden 128 -> out 128.
    # B=50 exercises the >=2-step grid AND the ragged (masked) last tile.
    B, D_IN, D_HID, D_OUT = 50, 64, 128, 128
    x = jax.random.normal(k_x, (B, D_IN), dtype=jnp.float32)
    params = make_params(k_p, D_IN, D_HID, D_OUT)

    out = transformation_forward(x, params)        # tile=32, grid=(2,)
    out = jax.block_until_ready(out)

    ref = reference_forward(x, params)
    assert out.shape == (B, D_OUT)
    assert jnp.allclose(out, ref, atol=2e-2, rtol=2e-2), "mismatch vs reference"

    print("KERNEL_OK")
</pallas_src>

<mosaic_0001>
module attributes {stable_mosaic.version = 11 : i64} {
  func.func @_mlp_kernel(%arg0: i32, %arg1: memref<32x64xf32, #tpu.memory_space<vmem>>, %arg2: memref<64x128xbf16, #tpu.memory_space<vmem>>, %arg3: memref<1x128xf32, #tpu.memory_space<vmem>>, %arg4: memref<128x128xbf16, #tpu.memory_space<vmem>>, %arg5: memref<1x128xf32, #tpu.memory_space<vmem>>, %arg6: memref<128x128xbf16, #tpu.memory_space<vmem>>, %arg7: memref<1x128xf32, #tpu.memory_space<vmem>>, %arg8: memref<32x128xf32, #tpu.memory_space<vmem>>) attributes {dimension_semantics = [#tpu.dimension_semantics<parallel>], iteration_bounds = array<i64: 2>, scalar_prefetch = 0 : i64, scratch_operands = 0 : i64, tpu.core_type = #tpu.core_type<tc>, window_params = [{transform_indices = @transform_0, window_bounds = array<i64: 32, 64>}, {pipeline_mode = #tpu.pipeline_mode<synchronous>, transform_indices = @transform_1, window_bounds = array<i64: 64, 128>}, {pipeline_mode = #tpu.pipeline_mode<synchronous>, transform_indices = @transform_2, window_bounds = array<i64: 1, 128>}, {pipeline_mode = #tpu.pipeline_mode<synchronous>, transform_indices = @transform_3, window_bounds = array<i64: 128, 128>}, {pipeline_mode = #tpu.pipeline_mode<synchronous>, transform_indices = @transform_4, window_bounds = array<i64: 1, 128>}, {pipeline_mode = #tpu.pipeline_mode<synchronous>, transform_indices = @transform_5, window_bounds = array<i64: 128, 128>}, {pipeline_mode = #tpu.pipeline_mode<synchronous>, transform_indices = @transform_6, window_bounds = array<i64: 1, 128>}, {transform_indices = @transform_7, window_bounds = array<i64: 32, 128>}]} {
    %c0 = arith.constant 0 : index
    %c0_0 = arith.constant 0 : index
    %0 = vector.load %arg1[%c0, %c0_0] : memref<32x64xf32, #tpu.memory_space<vmem>>, vector<32x64xf32>
    %1 = arith.truncf %0 : vector<32x64xf32> to vector<32x64xbf16>
    %c0_1 = arith.constant 0 : index
    %c0_2 = arith.constant 0 : index
    %2 = vector.load %arg2[%c0_1, %c0_2] : memref<64x128xbf16, #tpu.memory_space<vmem>>, vector<64x128xbf16>
    %cst = arith.constant dense<0.000000e+00> : vector<32x128xf32>
    %3 = tpu.matmul %1, %2, %cst {dimension_numbers = #tpu.dot_dimension_numbers<[1], [0], [0], [1], [0, 0, 1, 1], [], []>} : vector<32x64xbf16>, vector<64x128xbf16>, vector<32x128xf32> -> vector<32x128xf32>
    %c0_3 = arith.constant 0 : index
    %c0_4 = arith.constant 0 : index
    %4 = vector.load %arg3[%c0_3, %c0_4] : memref<1x128xf32, #tpu.memory_space<vmem>>, vector<1x128xf32>
    %5 = vector.broadcast %4 : vector<1x128xf32> to vector<32x128xf32>
    %6 = arith.addf %3, %5 : vector<32x128xf32>
    %cst_5 = arith.constant 0.000000e+00 : f32
    %7 = vector.broadcast %cst_5 : f32 to vector<32x128xf32>
    %8 = arith.maximumf %6, %7 : vector<32x128xf32>
    %9 = arith.truncf %8 : vector<32x128xf32> to vector<32x128xbf16>
    %c0_6 = arith.constant 0 : index
    %c0_7 = arith.constant 0 : index
    %10 = vector.load %arg4[%c0_6, %c0_7] : memref<128x128xbf16, #tpu.memory_space<vmem>>, vector<128x128xbf16>
    %cst_8 = arith.constant dense<0.000000e+00> : vector<32x128xf32>
    %11 = tpu.matmul %9, %10, %cst_8 {dimension_numbers = #tpu.dot_dimension_numbers<[1], [0], [0], [1], [0, 0, 1, 1], [], []>} : vector<32x128xbf16>, vector<128x128xbf16>, vector<32x128xf32> -> vector<32x128xf32>
    %c0_9 = arith.constant 0 : index
    %c0_10 = arith.constant 0 : index
    %12 = vector.load %arg5[%c0_9, %c0_10] : memref<1x128xf32, #tpu.memory_space<vmem>>, vector<1x128xf32>
    %13 = vector.broadcast %12 : vector<1x128xf32> to vector<32x128xf32>
    %14 = arith.addf %11, %13 : vector<32x128xf32>
    %cst_11 = arith.constant 0.000000e+00 : f32
    %15 = vector.broadcast %cst_11 : f32 to vector<32x128xf32>
    %16 = arith.maximumf %14, %15 : vector<32x128xf32>
    %17 = arith.truncf %16 : vector<32x128xf32> to vector<32x128xbf16>
    %c0_12 = arith.constant 0 : index
    %c0_13 = arith.constant 0 : index
    %18 = vector.load %arg6[%c0_12, %c0_13] : memref<128x128xbf16, #tpu.memory_space<vmem>>, vector<128x128xbf16>
    %cst_14 = arith.constant dense<0.000000e+00> : vector<32x128xf32>
    %19 = tpu.matmul %17, %18, %cst_14 {dimension_numbers = #tpu.dot_dimension_numbers<[1], [0], [0], [1], [0, 0, 1, 1], [], []>} : vector<32x128xbf16>, vector<128x128xbf16>, vector<32x128xf32> -> vector<32x128xf32>
    %c0_15 = arith.constant 0 : index
    %c0_16 = arith.constant 0 : index
    %20 = vector.load %arg7[%c0_15, %c0_16] : memref<1x128xf32, #tpu.memory_space<vmem>>, vector<1x128xf32>
    %21 = vector.broadcast %20 : vector<1x128xf32> to vector<32x128xf32>
    %22 = arith.addf %19, %21 : vector<32x128xf32>
    %c0_17 = arith.constant 0 : index
    %c0_18 = arith.constant 0 : index
    %23 = vector.load %arg8[%c0_17, %c0_18] : memref<32x128xf32, #tpu.memory_space<vmem>>, vector<32x128xf32>
    tpu.vector_store %arg8[%c0_17, %c0_18], %22 {strides = array<i32>} : memref<32x128xf32, #tpu.memory_space<vmem>>, vector<32x128xf32>,
    return
  }
  func.func @transform_0(%arg0: i32) -> (i32, i32) {
    %c0_i32 = arith.constant 0 : i32
    %c0_i32_0 = arith.constant 0 : i32
    return %arg0, %c0_i32 : i32, i32
  }
  func.func @transform_1(%arg0: i32) -> (i32, i32) {
    %c0_i32 = arith.constant 0 : i32
    %c0_i32_0 = arith.constant 0 : i32
    %c0_i32_1 = arith.constant 0 : i32
    return %c0_i32, %c0_i32_0 : i32, i32
  }
  func.func @transform_2(%arg0: i32) -> (i32, i32) {
    %c0_i32 = arith.constant 0 : i32
    %c0_i32_0 = arith.constant 0 : i32
    %c0_i32_1 = arith.constant 0 : i32
    return %c0_i32, %c0_i32_0 : i32, i32
  }
  func.func @transform_3(%arg0: i32) -> (i32, i32) {
    %c0_i32 = arith.constant 0 : i32
    %c0_i32_0 = arith.constant 0 : i32
    %c0_i32_1 = arith.constant 0 : i32
    return %c0_i32, %c0_i32_0 : i32, i32
  }
  func.func @transform_4(%arg0: i32) -> (i32, i32) {
    %c0_i32 = arith.constant 0 : i32
    %c0_i32_0 = arith.constant 0 : i32
    %c0_i32_1 = arith.constant 0 : i32
    return %c0_i32, %c0_i32_0 : i32, i32
  }
  func.func @transform_5(%arg0: i32) -> (i32, i32) {
    %c0_i32 = arith.constant 0 : i32
    %c0_i32_0 = arith.constant 0 : i32
    %c0_i32_1 = arith.constant 0 : i32
    return %c0_i32, %c0_i32_0 : i32, i32
  }
  func.func @transform_6(%arg0: i32) -> (i32, i32) {
    %c0_i32 = arith.constant 0 : i32
    %c0_i32_0 = arith.constant 0 : i32
    %c0_i32_1 = arith.constant 0 : i32
    return %c0_i32, %c0_i32_0 : i32, i32
  }
  func.func @transform_7(%arg0: i32) -> (i32, i32) {
    %c0_i32 = arith.constant 0 : i32
    %c0_i32_0 = arith.constant 0 : i32
    return %arg0, %c0_i32 : i32, i32
  }
}

</mosaic_0001>

<llo_original>
// kernel: tpu_custom_call.1
$region0: #{tpu_custom_call.1}
  #allocation0 [shape = 'u32[]', space=smem, size = 0x4, offset = 0x4, fixed_abs, tag = 'smem constant byte address 0x4 - core index']
  #allocation1 [shape = 'u32[72,128]{1,0:T(1,128)}', space=vmem, size = 0x9000, scoped, tag = 'internal scratch']
  %s0 = inlined_call_operand.hbm [shape: f32[50,64], index: 0, kind: input, shape index: {}]
  %s1 = inlined_call_operand.hbm [shape: bf16[64,128], index: 1, kind: input, shape index: {}]
  %s2 = inlined_call_operand.vmem [shape: f32[1,128], index: 2, kind: input, shape index: {}]
  %s3 = inlined_call_operand.hbm [shape: bf16[128,128], index: 3, kind: input, shape index: {}]
  %s4 = inlined_call_operand.vmem [shape: f32[1,128], index: 4, kind: input, shape index: {}]
  %s5 = inlined_call_operand.hbm [shape: bf16[128,128], index: 5, kind: input, shape index: {}]
  %s6 = inlined_call_operand.vmem [shape: f32[1,128], index: 6, kind: input, shape index: {}]
  %s7 = inlined_call_operand.hbm [shape: f32[50,128], index: 7, kind: output, shape index: {}]
  %s8 = sld [smem:[#allocation0]]
  $region77: #{tpu_custom_call.1} parent=0
    _
  %s10 = ssub.s32 1, %s8
  %s11 = scalar_select 0, %s10, %s8
  $region1: #{tpu_custom_call.1} parent=0
    #allocation2 [shape = 'u8[32768]{0}', space=vmem, size = 0x8000, scoped, tag = 'input window, operand 0']
    #allocation3 [shape = 's32[2]{0}', space=sflag, size = 0x8, scoped, tag = 'scoped memory for tpu_custom_call.1']
    #allocation4 [shape = 's32[2]{0}', space=sflag, size = 0x8, scoped, tag = 'scoped memory for tpu_custom_call.1']
    #allocation5 [shape = 'u8[16384]{0}', space=vmem, size = 0x4000, scoped, tag = 'input window, operand 1, single buffered']
    #allocation6 [shape = 's32[1]{0}', space=sflag, size = 0x4, scoped, tag = 'scoped memory for tpu_custom_call.1']
    #allocation7 [shape = 'u8[32768]{0}', space=vmem, size = 0x8000, scoped, tag = 'input window, operand 3, single buffered']
    #allocation8 [shape = 'u8[32768]{0}', space=vmem, size = 0x8000, scoped, tag = 'input window, operand 5, single buffered']
    #allocation9 [shape = 's32[1]{0}', space=sflag, size = 0x4, scoped, tag = 'scoped memory for tpu_custom_call.1']
    #allocation10 [shape = 'u8[32768]{0}', space=vmem, size = 0x8000, scoped, tag = 'output window, operand 0']
    %12 = vsyncpa [#allocation3], 0
    %s13 = scalar_lea.sflag [#allocation3], 1
    %14 = vsyncpa %s13, 0
    %15 = vsyncpa [#allocation6], 0
    %16 = vsyncpa [#allocation9], 0
    %17 = vsyncpa [#allocation4], 0
    %s18 = scalar_lea.sflag [#allocation4], 1
    %19 = vsyncpa %s18, 0
    loop: start=0, step=1, limit=4
    $region2: #{tpu_custom_call.1} parent=1 // loop_pre_header
      _
    $region3: #{tpu_custom_call.1} parent=1 // loop_header
      %s21 = sphi 0, %s25
      %p22 = scmp.ge.s32.totalorder %s21, 4
      %s31 = sphi 0, %s33
      %s34 = sphi 0, %s31
      %s35 = sphi 0, %s34
      %s51 = sphi 0, %s35
      %s55 = sphi 0, %s55
      %s57 = sphi 0, %s55
      %s58 = sphi 0, %s57
      %s72 = sphi 0, %s58
      %s76 = sphi 0, %s76
      %s78 = sphi 0, %s76
      %s79 = sphi 0, %s78
      %s93 = sphi 0, %s79
      %s97 = sphi 0, %s97
      %s99 = sphi 0, %s97
      %s100 = sphi 0, %s99
      %s114 = sphi 0, %s100
      %s118 = sphi 0, %s118
      %s120 = sphi 0, %s118
      %s121 = sphi 0, %s120
      %s135 = sphi 0, %s121
      %s139 = sphi 0, %s139
      %s141 = sphi 0, %s139
      %s142 = sphi 0, %s141
      %s156 = sphi 0, %s142
      %s160 = sphi 0, %s160
      %s162 = sphi 0, %s160
      %s163 = sphi 0, %s162
      %s177 = sphi 0, %s163
      %s183 = sphi 0, %s185
      %s186 = sphi 0, %s183
      %s187 = sphi 0, %s186
      %s203 = sphi 0, %s187
    $region4: #{tpu_custom_call.1} parent=1 // loop_header_branch
      %24 = sbr.rel (%p22) target = $region8
    $region5: #{tpu_custom_call.1} parent=1 // loop_body
      %s26 = ssub.s32 %s21, 1
      %s27 = ssub.s32 %s21, 2
      %s28 = sadd.s32 %s21, 1
      %s29 = ssub.s32 %s21, %s28
      %p30 = scmp.eq.s32.totalorder %s29, 0
      %s32 = sadd.s32 %s31, 1
      %s33 = scalar_select %p30, %s31, %s32
      %p36 = pneg %p30
      %p37 = scmp.eq.s32.totalorder %s21, 1
      %p38 = por %p36, %p37
      %p39 = scmp.ne.s32.totalorder %s31, %s34
      %p40 = scmp.eq.s32.totalorder %s21, 0
      %p41 = por %p39, %p40
      %p42 = scmp.ne.s32.totalorder %s31, %s34
      %p43 = scmp.eq.s32.totalorder %s26, 1
      %p44 = por %p42, %p43
      %p45 = scmp.ne.s32.totalorder %s34, %s35
      %p46 = scmp.eq.s32.totalorder %s26, 0
      %p47 = por %p45, %p46
      %p48 = scmp.ne.s32.totalorder %s34, %s35
      %p49 = scmp.eq.s32.totalorder %s27, 1
      %p50 = por %p48, %p49
      %p52 = scmp.ne.s32.totalorder %s35, %s51
      %p53 = scmp.eq.s32.totalorder %s27, 0
      %p54 = por %p52, %p53
      %s56 = sadd.s32 %s55, 1
      %p59 = scmp.eq.s32.totalorder %s21, 1
      %p60 = scmp.ne.s32.totalorder %s55, %s57
      %p61 = scmp.eq.s32.totalorder %s21, 0
      %p62 = por %p60, %p61
      %p63 = scmp.ne.s32.totalorder %s55, %s57
      %p64 = scmp.eq.s32.totalorder %s26, 1
      %p65 = por %p63, %p64
      %p66 = scmp.ne.s32.totalorder %s57, %s58
      %p67 = scmp.eq.s32.totalorder %s26, 0
      %p68 = por %p66, %p67
      %p69 = scmp.ne.s32.totalorder %s57, %s58
      %p70 = scmp.eq.s32.totalorder %s27, 1
      %p71 = por %p69, %p70
      %p73 = scmp.ne.s32.totalorder %s58, %s72
      %p74 = scmp.eq.s32.totalorder %s27, 0
      %p75 = por %p73, %p74
      %s77 = sadd.s32 %s76, 1
      %p80 = scmp.eq.s32.totalorder %s21, 1
      %p81 = scmp.ne.s32.totalorder %s76, %s78
      %p82 = scmp.eq.s32.totalorder %s21, 0
      %p83 = por %p81, %p82
      %p84 = scmp.ne.s32.totalorder %s76, %s78
      %p85 = scmp.eq.s32.totalorder %s26, 1
      %p86 = por %p84, %p85
      %p87 = scmp.ne.s32.totalorder %s78, %s79
      %p88 = scmp.eq.s32.totalorder %s26, 0
      %p89 = por %p87, %p88
      %p90 = scmp.ne.s32.totalorder %s78, %s79
      %p91 = scmp.eq.s32.totalorder %s27, 1
      %p92 = por %p90, %p91
      %p94 = scmp.ne.s32.totalorder %s79, %s93
      %p95 = scmp.eq.s32.totalorder %s27, 0
      %p96 = por %p94, %p95
      %s98 = sadd.s32 %s97, 1
      %p101 = scmp.eq.s32.totalorder %s21, 1
      %p102 = scmp.ne.s32.totalorder %s97, %s99
      %p103 = scmp.eq.s32.totalorder %s21, 0
      %p104 = por %p102, %p103
      %p105 = scmp.ne.s32.totalorder %s97, %s99
      %p106 = scmp.eq.s32.totalorder %s26, 1
      %p107 = por %p105, %p106
      %p108 = scmp.ne.s32.totalorder %s99, %s100
      %p109 = scmp.eq.s32.totalorder %s26, 0
      %p110 = por %p108, %p109
      %p111 = scmp.ne.s32.totalorder %s99, %s100
      %p112 = scmp.eq.s32.totalorder %s27, 1
      %p113 = por %p111, %p112
      %p115 = scmp.ne.s32.totalorder %s100, %s114
      %p116 = scmp.eq.s32.totalorder %s27, 0
      %p117 = por %p115, %p116
      %s119 = sadd.s32 %s118, 1
      %p122 = scmp.eq.s32.totalorder %s21, 1
      %p123 = scmp.ne.s32.totalorder %s118, %s120
      %p124 = scmp.eq.s32.totalorder %s21, 0
      %p125 = por %p123, %p124
      %p126 = scmp.ne.s32.totalorder %s118, %s120
      %p127 = scmp.eq.s32.totalorder %s26, 1
      %p128 = por %p126, %p127
      %p129 = scmp.ne.s32.totalorder %s120, %s121
      %p130 = scmp.eq.s32.totalorder %s26, 0
      %p131 = por %p129, %p130
      %p132 = scmp.ne.s32.totalorder %s120, %s121
      %p133 = scmp.eq.s32.totalorder %s27, 1
      %p134 = por %p132, %p133
      %p136 = scmp.ne.s32.totalorder %s121, %s135
      %p137 = scmp.eq.s32.totalorder %s27, 0
      %p138 = por %p136, %p137
      %s140 = sadd.s32 %s139, 1
      %p143 = scmp.eq.s32.totalorder %s21, 1
      %p144 = scmp.ne.s32.totalorder %s139, %s141
      %p145 = scmp.eq.s32.totalorder %s21, 0
      %p146 = por %p144, %p145
      %p147 = scmp.ne.s32.totalorder %s139, %s141
      %p148 = scmp.eq.s32.totalorder %s26, 1
      %p149 = por %p147, %p148
      %p150 = scmp.ne.s32.totalorder %s141, %s142
      %p151 = scmp.eq.s32.totalorder %s26, 0
      %p152 = por %p150, %p151
      %p153 = scmp.ne.s32.totalorder %s141, %s142
      %p154 = scmp.eq.s32.totalorder %s27, 1
      %p155 = por %p153, %p154
      %p157 = scmp.ne.s32.totalorder %s142, %s156
      %p158 = scmp.eq.s32.totalorder %s27, 0
      %p159 = por %p157, %p158
      %s161 = sadd.s32 %s160, 1
      %p164 = scmp.eq.s32.totalorder %s21, 1
      %p165 = scmp.ne.s32.totalorder %s160, %s162
      %p166 = scmp.eq.s32.totalorder %s21, 0
      %p167 = por %p165, %p166
      %p168 = scmp.ne.s32.totalorder %s160, %s162
      %p169 = scmp.eq.s32.totalorder %s26, 1
      %p170 = por %p168, %p169
      %p171 = scmp.ne.s32.totalorder %s162, %s163
      %p172 = scmp.eq.s32.totalorder %s26, 0
      %p173 = por %p171, %p172
      %p174 = scmp.ne.s32.totalorder %s162, %s163
      %p175 = scmp.eq.s32.totalorder %s27, 1
      %p176 = por %p174, %p175
      %p178 = scmp.ne.s32.totalorder %s163, %s177
      %p179 = scmp.eq.s32.totalorder %s27, 0
      %p180 = por %p178, %p179
      %s181 = ssub.s32 %s21, %s28
      %p182 = scmp.eq.s32.totalorder %s181, 0
      %s184 = sadd.s32 %s183, 1
      %s185 = scalar_select %p182, %s183, %s184
      %p188 = pneg %p182
      %p189 = scmp.eq.s32.totalorder %s21, 1
      %p190 = por %p188, %p189
      %p191 = scmp.ne.s32.totalorder %s183, %s186
      %p192 = scmp.eq.s32.totalorder %s21, 0
      %p193 = por %p191, %p192
      %p194 = scmp.ne.s32.totalorder %s183, %s186
      %p195 = scmp.eq.s32.totalorder %s26, 1
      %p196 = por %p194, %p195
      %p197 = scmp.ne.s32.totalorder %s186, %s187
      %p198 = scmp.eq.s32.totalorder %s26, 0
      %p199 = por %p197, %p198
      %p200 = scmp.ne.s32.totalorder %s186, %s187
      %p201 = scmp.eq.s32.totalorder %s27, 1
      %p202 = por %p200, %p201
      %p204 = scmp.ne.s32.totalorder %s187, %s203
      %p205 = scmp.eq.s32.totalorder %s27, 0
      %p206 = por %p204, %p205
      %p207 = scmp.le.s32.totalorder 1, %s21
      %p208 = scmp.lt.s32.totalorder %s21, 3
      %p209 = pnand %p207, %p208
      %p210 = pneg %p209
      // Predicated region
      $region9: #{tpu_custom_call.1} parent=5 // pred_check
        _
      $region10: #{tpu_custom_call.1} parent=5 // pred_check_branch
        %212 = sbr.rel (%p209) target = $region12
      $region11: #{tpu_custom_call.1} parent=5 // pred_region
        %s213 = ssub.s32 %s21, 1
        // Predicated region
        $region13: #{tpu_custom_call.1} parent=11 // pred_check
          %p214 = pneg %p68
        $region14: #{tpu_custom_call.1} parent=11 // pred_check_branch
          %216 = sbr.rel (%p214) target = $region16
        $region15: #{tpu_custom_call.1} parent=11 // pred_region
          %218 = vsyncadd [#allocation6], 0
          %s219 = sshll.u32 %s1, 4
          %s220 = int_to_ptr.hbm [resolvable:$true] %s219
          %s221 = sshll.u32 [#allocation5], 4
          %s222 = int_to_ptr.vmem [resolvable:$true] %s221
          %227 = dma.hbm_to_vmem [thread:$0]  %s220, 512, %s222, [#allocation6], 64, 64, 4
        $region16: #{tpu_custom_call.1} parent=11 // pred_fallthru
          _
        // Predicated region
        $region17: #{tpu_custom_call.1} parent=11 // pred_check
          %p228 = pneg %p89
        $region18: #{tpu_custom_call.1} parent=11 // pred_check_branch
          %230 = sbr.rel (%p228) target = $region20
        $region19: #{tpu_custom_call.1} parent=11 // pred_region
          _
        $region20: #{tpu_custom_call.1} parent=11 // pred_fallthru
          _
        // Predicated region
        $region21: #{tpu_custom_call.1} parent=11 // pred_check
          %p231 = pneg %p110
        $region22: #{tpu_custom_call.1} parent=11 // pred_check_branch
          %233 = sbr.rel (%p231) target = $region24
        $region23: #{tpu_custom_call.1} parent=11 // pred_region
          %235 = vsyncadd [#allocation6], 0
          %s236 = sshll.u32 %s3, 4
          %s237 = int_to_ptr.hbm [resolvable:$true] %s236
          %s238 = sshll.u32 [#allocation7], 4
          %s239 = int_to_ptr.vmem [resolvable:$true] %s238
          %244 = dma.hbm_to_vmem [thread:$0]  %s237, 1024, %s239, [#allocation6], 64, 64, 4
        $region24: #{tpu_custom_call.1} parent=11 // pred_fallthru
          _
        // Predicated region
        $region25: #{tpu_custom_call.1} parent=11 // pred_check
          %p245 = pneg %p131
        $region26: #{tpu_custom_call.1} parent=11 // pred_check_branch
          %247 = sbr.rel (%p245) target = $region28
        $region27: #{tpu_custom_call.1} parent=11 // pred_region
          _
        $region28: #{tpu_custom_call.1} parent=11 // pred_fallthru
          _
        // Predicated region
        $region29: #{tpu_custom_call.1} parent=11 // pred_check
          %p248 = pneg %p152
        $region30: #{tpu_custom_call.1} parent=11 // pred_check_branch
          %250 = sbr.rel (%p248) target = $region32
        $region31: #{tpu_custom_call.1} parent=11 // pred_region
          %252 = vsyncadd [#allocation9], 0
          %s253 = sshll.u32 %s5, 4
          %s254 = int_to_ptr.hbm [resolvable:$true] %s253
          %s255 = sshll.u32 [#allocation8], 4
          %s256 = int_to_ptr.vmem [resolvable:$true] %s255
          %261 = dma.hbm_to_vmem [thread:$0]  %s254, 1024, %s256, [#allocation9], 64, 64, 4
        $region32: #{tpu_custom_call.1} parent=11 // pred_fallthru
          _
        // Predicated region
        $region33: #{tpu_custom_call.1} parent=11 // pred_check
          %p262 = pneg %p173
        $region34: #{tpu_custom_call.1} parent=11 // pred_check_branch
          %264 = sbr.rel (%p262) target = $region36
        $region35: #{tpu_custom_call.1} parent=11 // pred_region
          _
        $region36: #{tpu_custom_call.1} parent=11 // pred_fallthru
          _
      $region12: #{tpu_custom_call.1} parent=5 // pred_fallthru
        _
      %p265 = scmp.lt.s32.totalorder %s21, 2
      // Predicated region
      $region37: #{tpu_custom_call.1} parent=5 // pred_check
        %p266 = pneg %p265
      $region38: #{tpu_custom_call.1} parent=5 // pred_check_branch
        %268 = sbr.rel (%p266) target = $region40
      $region39: #{tpu_custom_call.1} parent=5 // pred_region
        // Predicated region
        $region41: #{tpu_custom_call.1} parent=39 // pred_check
          %p269 = pneg %p41
        $region42: #{tpu_custom_call.1} parent=39 // pred_check_branch
          %271 = sbr.rel (%p269) target = $region44
        $region43: #{tpu_custom_call.1} parent=39 // pred_region
          %s272 = sand.u32 %s31, 1
          %s273 = scalar_lea.sflag [#allocation3], %s272
          %s274 = sand.u32 %s31, 1
          %s275 = smul.addr %s274, 32
          %s276 = scalar_lea.vmem [#allocation2], %s275
          %s277 = smul.u32 4, %s21
          %s278 = ssub.s32 7, %s277
          %p279 = scmp.lt.s32.totalorder %s278, 4
          %s280 = scalar_select %p279, %s278, 4
          %s281 = smul.u32 8, %s280
          %s282 = ssub.s32 32, %s281
          %s283 = sshll.u32 %s282, 4
          %284 = vsyncadd %s273, %s283
          %p285 = scmp.ne.s32.totalorder 0, %s281
          %s286 = smul.addr %s277, 8
          %s287 = scalar_lea.hbm %s0, %s286
          %s288 = smul.u32 8, %s280
          %s289 = sshll.u32 %s287, 4
          %s290 = int_to_ptr.hbm [resolvable:$true] %s289
          %s291 = sshll.u32 %s276, 4
          %s292 = int_to_ptr.vmem [resolvable:$true] %s291
          %s293 = sshll.u32 %s288, 4
          %297 = dma.hbm_to_vmem [thread:$0]  (%p285), %s290, %s293, %s292, %s273, 128, 128, 8
        $region44: #{tpu_custom_call.1} parent=39 // pred_fallthru
          _
      $region40: #{tpu_custom_call.1} parent=5 // pred_fallthru
        _
      %p298 = scmp.le.s32.totalorder 1, %s21
      %p299 = scmp.lt.s32.totalorder %s21, 3
      %p300 = pnand %p298, %p299
      %p301 = pneg %p300
      // Predicated region
      $region45: #{tpu_custom_call.1} parent=5 // pred_check
        _
      $region46: #{tpu_custom_call.1} parent=5 // pred_check_branch
        %303 = sbr.rel (%p300) target = $region48
      $region47: #{tpu_custom_call.1} parent=5 // pred_region
        %s304 = ssub.s32 %s21, 1
        %s305 = sand.u32 %s34, 1
        %s306 = scalar_lea.sflag [#allocation3], %s305
        %s307 = sand.u32 %s34, 1
        %s308 = smul.addr %s307, 32
        %s309 = scalar_lea.vmem [#allocation2], %s308
        // Predicated region
        $region49: #{tpu_custom_call.1} parent=47 // pred_check
          %p310 = pneg %p47
        $region50: #{tpu_custom_call.1} parent=47 // pred_check_branch
          %312 = sbr.rel (%p310) target = $region52
        $region51: #{tpu_custom_call.1} parent=47 // pred_region
          %314 = dma.done %s306, 512
        $region52: #{tpu_custom_call.1} parent=47 // pred_fallthru
          _
        // Predicated region
        $region53: #{tpu_custom_call.1} parent=47 // pred_check
          %p315 = pneg %p68
        $region54: #{tpu_custom_call.1} parent=47 // pred_check_branch
          %317 = sbr.rel (%p315) target = $region56
        $region55: #{tpu_custom_call.1} parent=47 // pred_region
          %319 = dma.done [#allocation6], 512
        $region56: #{tpu_custom_call.1} parent=47 // pred_fallthru
          _
        // Predicated region
        $region57: #{tpu_custom_call.1} parent=47 // pred_check
          %p320 = pneg %p110
        $region58: #{tpu_custom_call.1} parent=47 // pred_check_branch
          %322 = sbr.rel (%p320) target = $region60
        $region59: #{tpu_custom_call.1} parent=47 // pred_region
          %324 = dma.done [#allocation6], 1024
        $region60: #{tpu_custom_call.1} parent=47 // pred_fallthru
          _
        // Predicated region
        $region61: #{tpu_custom_call.1} parent=47 // pred_check
          %p325 = pneg %p152
        $region62: #{tpu_custom_call.1} parent=47 // pred_check_branch
          %327 = sbr.rel (%p325) target = $region64
        $region63: #{tpu_custom_call.1} parent=47 // pred_region
          %329 = dma.done [#allocation9], 1024
        $region64: #{tpu_custom_call.1} parent=47 // pred_fallthru
          _
        %s330 = sand.u32 %s34, 1
        %s331 = scalar_lea.sflag [#allocation3], %s330
        %s332 = sand.u32 %s34, 1
        %s333 = smul.addr %s332, 32
        %s334 = scalar_lea.vmem [#allocation2], %s333
        %p335 = pneg %p47
        %p336 = pneg %p44
        %p337 = pneg %p68
        %p338 = pneg %p65
        %p339 = pneg %p89
        %p340 = pneg %p86
        %p341 = pneg %p110
        %p342 = pneg %p107
        %p343 = pneg %p131
        %p344 = pneg %p128
        %p345 = pneg %p152
        %p346 = pneg %p149
        %p347 = pneg %p173
        %p348 = pneg %p170
        %p349 = pneg %p199
        %p350 = pneg %p196
        %s351 = sand.u32 %s186, 1
        %s352 = scalar_lea.sflag [#allocation4], %s351
        %s353 = sand.u32 %s186, 1
        %s354 = smul.addr %s353, 32
        %s355 = scalar_lea.vmem [#allocation10], %s354
        %s356 = smul.u32 4, %s26
        %s357 = ssub.s32 7, %s356
        %p358 = scmp.lt.s32.totalorder %s357, 4
        %s359 = scalar_select %p358, %s357, 4
        %s360 = smul.u32 8, %s359
        %s361 = smul.u32 4, %s26
        %s362 = ssub.s32 7, %s361
        %p363 = scmp.lt.s32.totalorder %s362, 4
        %s364 = scalar_select %p363, %s362, 4
        %s365 = smul.u32 8, %s364
        %v367 = vld [vmem:[%s309] sm:$0xff]
        %v368 = vld [vmem:[%s309 + $0x8] sm:$0xff]
        %v369 = vld [vmem:[%s309 + $0x10] sm:$0xff]
        %v370 = vld [vmem:[%s309 + $0x18] sm:$0xff]
        %v371 = vpack.c.bf16 %v368, %v367
        %v372 = vpack.c.bf16 %v370, %v369
        %v373 = vld [vmem:[#allocation5] sm:$0xf]
        %v374 = vld [vmem:[#allocation5 + $0x4] sm:$0xf]
        %v375 = vld [vmem:[#allocation5 + $0x8] sm:$0xf]
        %v376 = vld [vmem:[#allocation5 + $0xc] sm:$0xf]
        %v377 = vld [vmem:[#allocation5 + $0x10] sm:$0xf]
        %v378 = vld [vmem:[#allocation5 + $0x14] sm:$0xf]
        %v379 = vld [vmem:[#allocation5 + $0x18] sm:$0xf]
        %v380 = vld [vmem:[#allocation5 + $0x1c] sm:$0xf]
        %v381 = vld [vmem:[%s2] sm:$0x1]
        %v383 = vperm.slane %v381, 0
        %v393 = vunpack.c.l.b16 %v373
        %v394 = vunpack.c.l.b16 %v374
        %v395 = vunpack.c.l.b16 %v375
        %v396 = vunpack.c.l.b16 %v376
        %v397 = vunpack.c.l.b16 %v377
        %v398 = vunpack.c.l.b16 %v378
        %v399 = vunpack.c.l.b16 %v379
        %v400 = vunpack.c.l.b16 %v380
        %v401 = vpack.c.b16 %v394, %v393
        %v402 = vpack.c.b16 %v396, %v395
        %v403 = vpack.c.b16 %v398, %v397
        %v404 = vpack.c.b16 %v400, %v399
        %vm409 = vcmask 523264
        %v411 = vsel %vm409, %v371, 0
        %v414 = vsel %vm409, %v372, 0
        %416 = vmatpush.bf16.msra.mxu0 0
        %417 = vmatpush.bf16.msra.mxu0 0
        %418 = vmatpush.bf16.msra.mxu0 0
        %419 = vmatpush.bf16.msra.mxu0 0
        %420 = vmatpush.bf16.msra.mxu0 %v404
        %421 = vmatpush.bf16.msra.mxu0 %v403
        %422 = vmatpush.bf16.msra.mxu0 %v402
        %423 = vmatpush.bf16.msra.mxu0 %v401
        %424 = vmatmul.bf16.gmra.mxu0 %v411
        %v425 = vpop.f32.mrf.mxu0
        %v426 = vadd.f32 %v383, %v425
        %v427 = vpop.f32.mrf.mxu0
        %v428 = vadd.f32 %v383, %v427
        %429 = vmatmul.bf16.gmra.mxu0 %v414
        %v430 = vpop.f32.mrf.mxu0
        %v431 = vadd.f32 %v383, %v430
        %v432 = vpop.f32.mrf.mxu0
        %v433 = vadd.f32 %v383, %v432
        %434 = vdwg.mxu0
        %v435 = vmax.f32 %v426, 0.0
        %v436 = vmax.f32 %v428, 0.0
        %v437 = vmax.f32 %v431, 0.0
        %v438 = vmax.f32 %v433, 0.0
        %v439 = vpack.c.bf16 %v436, %v435
        %v440 = vpack.c.bf16 %v438, %v437
        %v441 = vld [vmem:[#allocation7] sm:$0xf]
        %v442 = vld [vmem:[#allocation7 + $0x4] sm:$0xf]
        %v443 = vld [vmem:[#allocation7 + $0x8] sm:$0xf]
        %v444 = vld [vmem:[#allocation7 + $0xc] sm:$0xf]
        %v445 = vld [vmem:[#allocation7 + $0x10] sm:$0xf]
        %v446 = vld [vmem:[#allocation7 + $0x14] sm:$0xf]
        %v447 = vld [vmem:[#allocation7 + $0x18] sm:$0xf]
        %v448 = vld [vmem:[#allocation7 + $0x1c] sm:$0xf]
        %v449 = vld [vmem:[#allocation7 + $0x20] sm:$0xf]
        %v450 = vld [vmem:[#allocation7 + $0x24] sm:$0xf]
        %v451 = vld [vmem:[#allocation7 + $0x28] sm:$0xf]
        %v452 = vld [vmem:[#allocation7 + $0x2c] sm:$0xf]
        %v453 = vld [vmem:[#allocation7 + $0x30] sm:$0xf]
        %v454 = vld [vmem:[#allocation7 + $0x34] sm:$0xf]
        %v455 = vld [vmem:[#allocation7 + $0x38] sm:$0xf]
        %v456 = vld [vmem:[#allocation7 + $0x3c] sm:$0xf]
        %v457 = vld [vmem:[%s4] sm:$0x1]
        %v459 = vperm.slane %v457, 0
        %v477 = vunpack.c.l.b16 %v441
        %v478 = vunpack.c.l.b16 %v442
        %v479 = vunpack.c.l.b16 %v443
        %v480 = vunpack.c.l.b16 %v444
        %v481 = vunpack.c.l.b16 %v445
        %v482 = vunpack.c.l.b16 %v446
        %v483 = vunpack.c.l.b16 %v447
        %v484 = vunpack.c.l.b16 %v448
        %v485 = vunpack.c.l.b16 %v449
        %v486 = vunpack.c.l.b16 %v450
        %v487 = vunpack.c.l.b16 %v451
        %v488 = vunpack.c.l.b16 %v452
        %v489 = vunpack.c.l.b16 %v453
        %v490 = vunpack.c.l.b16 %v454
        %v491 = vunpack.c.l.b16 %v455
        %v492 = vunpack.c.l.b16 %v456
        %v493 = vpack.c.b16 %v478, %v477
        %v494 = vpack.c.b16 %v480, %v479
        %v495 = vpack.c.b16 %v482, %v481
        %v496 = vpack.c.b16 %v484, %v483
        %v497 = vpack.c.b16 %v486, %v485
        %v498 = vpack.c.b16 %v488, %v487
        %v499 = vpack.c.b16 %v490, %v489
        %v500 = vpack.c.b16 %v492, %v491
        %509 = vmatpush.bf16.msra.mxu0 %v500
        %510 = vmatpush.bf16.msra.mxu0 %v499
        %511 = vmatpush.bf16.msra.mxu0 %v498
        %512 = vmatpush.bf16.msra.mxu0 %v497
        %513 = vmatpush.bf16.msra.mxu0 %v496
        %514 = vmatpush.bf16.msra.mxu0 %v495
        %515 = vmatpush.bf16.msra.mxu0 %v494
        %516 = vmatpush.bf16.msra.mxu0 %v493
        %517 = vmatmul.bf16.gmra.mxu0 %v439
        %v518 = vpop.f32.mrf.mxu0
        %v519 = vadd.f32 %v459, %v518
        %v520 = vpop.f32.mrf.mxu0
        %v521 = vadd.f32 %v459, %v520
        %522 = vmatmul.bf16.gmra.mxu0 %v440
        %v523 = vpop.f32.mrf.mxu0
        %v524 = vadd.f32 %v459, %v523
        %v525 = vpop.f32.mrf.mxu0
        %v526 = vadd.f32 %v459, %v525
        %527 = vdwg.mxu0
        %v528 = vmax.f32 %v519, 0.0
        %v529 = vmax.f32 %v521, 0.0
        %v530 = vmax.f32 %v524, 0.0
        %v531 = vmax.f32 %v526, 0.0
        %v532 = vpack.c.bf16 %v529, %v528
        %v533 = vpack.c.bf16 %v531, %v530
        %v534 = vld [vmem:[#allocation8] sm:$0xf]
        %v535 = vld [vmem:[#allocation8 + $0x4] sm:$0xf]
        %v536 = vld [vmem:[#allocation8 + $0x8] sm:$0xf]
        %v537 = vld [vmem:[#allocation8 + $0xc] sm:$0xf]
        %v538 = vld [vmem:[#allocation8 + $0x10] sm:$0xf]
        %v539 = vld [vmem:[#allocation8 + $0x14] sm:$0xf]
        %v540 = vld [vmem:[#allocation8 + $0x18] sm:$0xf]
        %v541 = vld [vmem:[#allocation8 + $0x1c] sm:$0xf]
        %v542 = vld [vmem:[#allocation8 + $0x20] sm:$0xf]
        %v543 = vld [vmem:[#allocation8 + $0x24] sm:$0xf]
        %v544 = vld [vmem:[#allocation8 + $0x28] sm:$0xf]
        %v545 = vld [vmem:[#allocation8 + $0x2c] sm:$0xf]
        %v546 = vld [vmem:[#allocation8 + $0x30] sm:$0xf]
        %v547 = vld [vmem:[#allocation8 + $0x34] sm:$0xf]
        %v548 = vld [vmem:[#allocation8 + $0x38] sm:$0xf]
        %v549 = vld [vmem:[#allocation8 + $0x3c] sm:$0xf]
        %v550 = vld [vmem:[%s6] sm:$0x1]
        %v552 = vperm.slane %v550, 0
        %v570 = vunpack.c.l.b16 %v534
        %v571 = vunpack.c.l.b16 %v535
        %v572 = vunpack.c.l.b16 %v536
        %v573 = vunpack.c.l.b16 %v537
        %v574 = vunpack.c.l.b16 %v538
        %v575 = vunpack.c.l.b16 %v539
        %v576 = vunpack.c.l.b16 %v540
        %v577 = vunpack.c.l.b16 %v541
        %v578 = vunpack.c.l.b16 %v542
        %v579 = vunpack.c.l.b16 %v543
        %v580 = vunpack.c.l.b16 %v544
        %v581 = vunpack.c.l.b16 %v545
        %v582 = vunpack.c.l.b16 %v546
        %v583 = vunpack.c.l.b16 %v547
        %v584 = vunpack.c.l.b16 %v548
        %v585 = vunpack.c.l.b16 %v549
        %v586 = vpack.c.b16 %v571, %v570
        %v587 = vpack.c.b16 %v573, %v572
        %v588 = vpack.c.b16 %v575, %v574
        %v589 = vpack.c.b16 %v577, %v576
        %v590 = vpack.c.b16 %v579, %v578
        %v591 = vpack.c.b16 %v581, %v580
        %v592 = vpack.c.b16 %v583, %v582
        %v593 = vpack.c.b16 %v585, %v584
        %602 = vmatpush.bf16.msra.mxu0 %v593
        %603 = vmatpush.bf16.msra.mxu0 %v592
        %604 = vmatpush.bf16.msra.mxu0 %v591
        %605 = vmatpush.bf16.msra.mxu0 %v590
        %606 = vmatpush.bf16.msra.mxu0 %v589
        %607 = vmatpush.bf16.msra.mxu0 %v588
        %608 = vmatpush.bf16.msra.mxu0 %v587
        %609 = vmatpush.bf16.msra.mxu0 %v586
        %610 = vmatmul.bf16.gmra.mxu0 %v532
        %v611 = vpop.f32.mrf.mxu0
        %v612 = vadd.f32 %v552, %v611
        %v613 = vpop.f32.mrf.mxu0
        %v614 = vadd.f32 %v552, %v613
        %615 = vmatmul.bf16.gmra.mxu0 %v533
        %v616 = vpop.f32.mrf.mxu0
        %v617 = vadd.f32 %v552, %v616
        %v618 = vpop.f32.mrf.mxu0
        %v619 = vadd.f32 %v552, %v618
        %620 = vdwg.mxu0
        %621 = vst [vmem:[%s355] sm:$0xff] %v612
        %622 = vst [vmem:[%s355 + $0x8] sm:$0xff] %v614
        %623 = vst [vmem:[%s355 + $0x10] sm:$0xff] %v617
        %624 = vst [vmem:[%s355 + $0x18] sm:$0xff] %v619
        %s625 = sand.u32 %s186, 1
        %s626 = scalar_lea.sflag [#allocation4], %s625
        %s627 = sand.u32 %s186, 1
        %s628 = smul.addr %s627, 32
        %s629 = scalar_lea.vmem [#allocation10], %s628
        // Predicated region
        $region65: #{tpu_custom_call.1} parent=47 // pred_check
          %p630 = pneg %p196
        $region66: #{tpu_custom_call.1} parent=47 // pred_check_branch
          %632 = sbr.rel (%p630) target = $region68
        $region67: #{tpu_custom_call.1} parent=47 // pred_region
          %s633 = smul.u32 4, %s26
          %s634 = ssub.s32 7, %s633
          %p635 = scmp.lt.s32.totalorder %s634, 4
          %s636 = scalar_select %p635, %s634, 4
          %s637 = smul.u32 8, %s636
          %s638 = ssub.s32 32, %s637
          %s639 = sshll.u32 %s638, 4
          %640 = vsyncadd %s626, %s639
          %p641 = scmp.ne.s32.totalorder 0, %s637
          %s642 = smul.addr %s633, 8
          %s643 = scalar_lea.hbm %s7, %s642
          %s644 = smul.u32 8, %s636
          %s645 = sshll.u32 %s629, 4
          %s646 = int_to_ptr.vmem [resolvable:$true] %s645
          %s647 = sshll.u32 %s643, 4
          %s648 = int_to_ptr.hbm [resolvable:$true] %s647
          %s649 = sshll.u32 %s644, 4
          %653 = dma.vmem_to_hbm [thread:$0]  (%p641), %s646, %s649, %s648, %s626, 128, 128, 8
        $region68: #{tpu_custom_call.1} parent=47 // pred_fallthru
          _
      $region48: #{tpu_custom_call.1} parent=5 // pred_fallthru
        _
      %p654 = scmp.le.s32.totalorder 2, %s21
      // Predicated region
      $region69: #{tpu_custom_call.1} parent=5 // pred_check
        %p655 = pneg %p654
      $region70: #{tpu_custom_call.1} parent=5 // pred_check_branch
        %657 = sbr.rel (%p655) target = $region72
      $region71: #{tpu_custom_call.1} parent=5 // pred_region
        %s658 = ssub.s32 %s21, 2
        // Predicated region
        $region73: #{tpu_custom_call.1} parent=71 // pred_check
          %p659 = pneg %p202
        $region74: #{tpu_custom_call.1} parent=71 // pred_check_branch
          %661 = sbr.rel (%p659) target = $region76
        $region75: #{tpu_custom_call.1} parent=71 // pred_region
          %s662 = sand.u32 %s187, 1
          %s663 = scalar_lea.sflag [#allocation4], %s662
          %s664 = sand.u32 %s187, 1
          %s665 = smul.addr %s664, 32
          %s666 = scalar_lea.vmem [#allocation10], %s665
          %668 = dma.done %s663, 512
        $region76: #{tpu_custom_call.1} parent=71 // pred_fallthru
          _
      $region72: #{tpu_custom_call.1} parent=5 // pred_fallthru
        _
    $region6: #{tpu_custom_call.1} parent=1 // loop_footer
      %s25 = sadd.s32 1, %s21
    $region7: #{tpu_custom_call.1} parent=1 // loop_footer_branch
      %20 = sbr.rel target = $region3
    $region8: #{tpu_custom_call.1} parent=1 // loop_exit
      _
    %669 = vsyncpa [#allocation3], 1
    %s670 = scalar_lea.sflag [#allocation3], 1
    %671 = vsyncpa %s670, 1
    %672 = vsyncpa [#allocation6], 1
    %673 = vsyncpa [#allocation9], 1
    %674 = vsyncpa [#allocation4], 1
    %s675 = scalar_lea.sflag [#allocation4], 1
    %676 = vsyncpa %s675, 1

</llo_original>
